<compile_context>
chip_gen: v5e
topology: v5e:2x2
jax: 0.10.0
libtpu: 0.0.40
codegen_flags: <defaults>
</compile_context>

<pallas_src>
import functools

import jax
import jax.numpy as jnp
from jax.experimental import pallas as pl
from jax.experimental.pallas import tpu as pltpu


def _round_up(x, m):
    return (x + m - 1) // m * m


# ----------------------------- Pallas kernel --------------------------------

def _neumf_kernel(num_fc, *refs):
    # refs layout:
    #   x_mlp (d_mlp, TB), u_mf (d_mf, TB), i_mf (d_mf, TB),
    #   (W_0, b_0), ..., (W_{num_fc-1}, b_{num_fc-1}),   W: (out, in) bf16, b: (out, 1) f32
    #   w_aff_mlp (layers[-1], 1), w_aff_mf (d_mf, 1), b_aff (1, 1),
    #   out_ref (8, TB)
    x_ref, u_mf_ref, i_mf_ref = refs[0], refs[1], refs[2]
    idx = 3

    # MLP tower (user/item MLP embeddings were pre-concatenated in the wrapper).
    x = x_ref[...]                                        # (d_mlp, TB) f32
    for _ in range(num_fc):
        w = refs[idx][...]                                # (out, in) bf16, resident
        b = refs[idx + 1][...]                            # (out, 1)  f32, resident
        idx += 2
        x = jnp.dot(w, x.astype(jnp.bfloat16),
                    preferred_element_type=jnp.float32) + b
        x = jnp.maximum(x, 0.0)                           # (out, TB) f32

    w_aff_mlp = refs[idx][...]                            # (layers[-1], 1) f32
    w_aff_mf = refs[idx + 1][...]                         # (d_mf, 1) f32
    b_aff = refs[idx + 2][...]                            # (1, 1) f32
    out_ref = refs[idx + 3]

    # MF branch: elementwise product.
    mf = u_mf_ref[...] * i_mf_ref[...]                    # (d_mf, TB) f32

    # Final affine as VPU multiply + sublane reduction (no N=1 MXU matmul,
    # no second concat: the affine dot is split into its MLP / MF halves).
    logit = (jnp.sum(x * w_aff_mlp, axis=0, keepdims=True)
             + jnp.sum(mf * w_aff_mf, axis=0, keepdims=True)
             + b_aff)                                     # (1, TB)
    rating = jax.nn.sigmoid(logit)

    # Lane-dense store: broadcast over the 8 sublanes of the output slab.
    out_ref[...] = jnp.broadcast_to(rating, out_ref.shape)


def neumf_forward_pallas(x_mlp, u_mf, i_mf, fc_params,
                         w_aff_mlp, w_aff_mf, b_aff, *, tile_batch):
    """Runs the NeuMF hot path.

    Args:
      x_mlp: (2*factor_num_mlp, B_pad) f32 pre-concatenated MLP embeddings.
      u_mf, i_mf: (factor_num_mf, B_pad) f32 MF embeddings.
      fc_params: list of (W, b) with W (out, in) bf16, b (out, 1) f32.
      w_aff_mlp: (layers[-1], 1) f32; w_aff_mf: (factor_num_mf, 1) f32;
      b_aff: (1, 1) f32.
      tile_batch: batch tile (multiple of 128, divides B_pad).
    Returns:
      (B_pad,) f32 sigmoid ratings (caller slices to the real batch).
    """
    d_mlp, b_pad = x_mlp.shape
    d_mf = u_mf.shape[0]
    assert tile_batch % 128 == 0 and b_pad % tile_batch == 0
    grid = (b_pad // tile_batch,)

    inputs = [x_mlp, u_mf, i_mf]
    for w, b in fc_params:
        inputs.extend([w, b])
    inputs.extend([w_aff_mlp, w_aff_mf, b_aff])

    def batch_spec(d):
        # Per-example data: tile the (lane) batch axis.
        return pl.BlockSpec((d, tile_batch), lambda i: (0, i))

    def resident_spec(arr):
        # Weights/biases: constant index map -> stay resident across the grid.
        return pl.BlockSpec(arr.shape, lambda i: (0, 0))

    in_specs = [batch_spec(d_mlp), batch_spec(d_mf), batch_spec(d_mf)]
    for w, b in fc_params:
        in_specs.append(resident_spec(w))
        in_specs.append(resident_spec(b))
    in_specs.append(resident_spec(w_aff_mlp))
    in_specs.append(resident_spec(w_aff_mf))
    in_specs.append(resident_spec(b_aff))

    out_specs = pl.BlockSpec((8, tile_batch), lambda i: (0, i))
    out_shape = jax.ShapeDtypeStruct((8, b_pad), jnp.float32)

    kernel = functools.partial(_neumf_kernel, len(fc_params))

    out = pl.pallas_call(
        kernel,
        out_shape=out_shape,
        grid=grid,
        in_specs=in_specs,
        out_specs=out_specs,
        compiler_params=pltpu.CompilerParams(
            dimension_semantics=("parallel",),
            vmem_limit_bytes=32 * 1024 * 1024),
    )(*inputs)
    return out[0]                                          # (B_pad,)


# --------------------------- parameter construction --------------------------

def xavier_uniform(key, shape):
    # shape = (out, in) like PyTorch Linear weight.
    fan_out, fan_in = shape
    limit = jnp.sqrt(6.0 / (fan_in + fan_out))
    return jax.random.uniform(key, shape, jnp.float32, -limit, limit)


def init_neumf_params(key, num_users, num_items, factor_num_mf, layers):
    factor_num_mlp = layers[0] // 2
    n_fc = len(layers) - 1
    keys = jax.random.split(key, 5 + n_fc)
    k = iter(keys)

    params = {}
    # Embedding tables stored feature-major (D, num_rows) so the wrapper's
    # gather directly produces the kernel's (D, B) layout (no transpose pass).
    params["emb_user_mlp_t"] = 0.01 * jax.random.normal(
        next(k), (factor_num_mlp, num_users), jnp.float32)
    params["emb_item_mlp_t"] = 0.01 * jax.random.normal(
        next(k), (factor_num_mlp, num_items), jnp.float32)
    params["emb_user_mf_t"] = 0.01 * jax.random.normal(
        next(k), (factor_num_mf, num_users), jnp.float32)
    params["emb_item_mf_t"] = 0.01 * jax.random.normal(
        next(k), (factor_num_mf, num_items), jnp.float32)

    fc_f32 = []
    for in_size, out_size in zip(layers[:-1], layers[1:]):
        w = xavier_uniform(next(k), (out_size, in_size))   # PyTorch (out, in)
        b = jnp.zeros((out_size,), jnp.float32)
        fc_f32.append((w, b))
    params["fc"] = fc_f32                                  # f32 reference copy

    aff_in = layers[-1] + factor_num_mf
    params["affine_w"] = xavier_uniform(next(k), (1, aff_in))
    params["affine_b"] = jnp.zeros((1,), jnp.float32)

    # Kernel-ready views.
    params["fc_kernel"] = [(w.astype(jnp.bfloat16), b.reshape(-1, 1))
                           for w, b in fc_f32]
    params["w_aff_mlp"] = params["affine_w"][0, :layers[-1]].reshape(-1, 1)
    params["w_aff_mf"] = params["affine_w"][0, layers[-1]:].reshape(-1, 1)
    params["b_aff"] = params["affine_b"].reshape(1, 1)
    return params


def neumf_apply(params, user_indices, item_indices, *, tile_batch=512):
    b = user_indices.shape[0]
    tb = _round_up(min(tile_batch, _round_up(b, 128)), 128)
    b_pad = _round_up(b, tb)

    u_idx = jnp.pad(user_indices, (0, b_pad - b))          # pad with index 0
    i_idx = jnp.pad(item_indices, (0, b_pad - b))

    # Glue: embedding gathers in plain JAX (feature-major tables -> (D, B)).
    u_mlp = jnp.take(params["emb_user_mlp_t"], u_idx, axis=1)
    i_mlp = jnp.take(params["emb_item_mlp_t"], i_idx, axis=1)
    x_mlp = jnp.concatenate([u_mlp, i_mlp], axis=0)        # (2*f_mlp, B_pad)
    u_mf = jnp.take(params["emb_user_mf_t"], u_idx, axis=1)
    i_mf = jnp.take(params["emb_item_mf_t"], i_idx, axis=1)

    out = neumf_forward_pallas(
        x_mlp, u_mf, i_mf, params["fc_kernel"],
        params["w_aff_mlp"], params["w_aff_mf"], params["b_aff"],
        tile_batch=tb)
    return out[:b]


def neumf_reference(params, user_indices, item_indices):
    # Pure-JAX f32 reference matching the PyTorch module.
    u_mlp = jnp.take(params["emb_user_mlp_t"], user_indices, axis=1).T
    i_mlp = jnp.take(params["emb_item_mlp_t"], item_indices, axis=1).T
    u_mf = jnp.take(params["emb_user_mf_t"], user_indices, axis=1).T
    i_mf = jnp.take(params["emb_item_mf_t"], item_indices, axis=1).T
    x = jnp.concatenate([u_mlp, i_mlp], axis=-1)
    for w, b in params["fc"]:
        x = jnp.maximum(x @ w.T + b, 0.0)
    vec = jnp.concatenate([x, u_mf * i_mf], axis=-1)
    logits = vec @ params["affine_w"].T + params["affine_b"]
    return jax.nn.sigmoid(logits)[:, 0]


# ---------------------------------- main -------------------------------------

if __name__ == "__main__":
    # Small deterministic config (args.factor_num=8, args.layers=[64,32,16,8]).
    num_users = 50
    num_items = 100
    factor_num_mf = 8
    layers = [64, 32, 16, 8]      # factor_num_mlp = 32
    batch = 200                   # pads to 256 -> 2 grid steps at tile_batch=128

    key = jax.random.PRNGKey(0)
    pkey, ukey, ikey = jax.random.split(key, 3)
    params = init_neumf_params(pkey, num_users, num_items, factor_num_mf, layers)

    user_idx = jax.random.randint(ukey, (batch,), 0, num_users, dtype=jnp.int32)
    item_idx = jax.random.randint(ikey, (batch,), 0, num_items, dtype=jnp.int32)

    rating = neumf_apply(params, user_idx, item_idx, tile_batch=128)
    rating = jax.block_until_ready(rating)

    ref = jax.block_until_ready(neumf_reference(params, user_idx, item_idx))
    assert rating.shape == (batch,)
    assert bool(jnp.all(jnp.isfinite(rating)))
    # bf16 MXU inputs with f32 accumulation -> tiny deviation from the f32 ref.
    assert jnp.allclose(rating, ref, atol=5e-3, rtol=5e-3), (
        float(jnp.max(jnp.abs(rating - ref))))

    print("KERNEL_OK")
</pallas_src>

<mosaic_0001>
module attributes {stable_mosaic.version = 11 : i64} {
  func.func @_neumf_kernel(%arg0: i32, %arg1: memref<64x128xf32, #tpu.memory_space<vmem>>, %arg2: memref<8x128xf32, #tpu.memory_space<vmem>>, %arg3: memref<8x128xf32, #tpu.memory_space<vmem>>, %arg4: memref<32x64xbf16, #tpu.memory_space<vmem>>, %arg5: memref<32x1xf32, #tpu.memory_space<vmem>>, %arg6: memref<16x32xbf16, #tpu.memory_space<vmem>>, %arg7: memref<16x1xf32, #tpu.memory_space<vmem>>, %arg8: memref<8x16xbf16, #tpu.memory_space<vmem>>, %arg9: memref<8x1xf32, #tpu.memory_space<vmem>>, %arg10: memref<8x1xf32, #tpu.memory_space<vmem>>, %arg11: memref<8x1xf32, #tpu.memory_space<vmem>>, %arg12: memref<1x1xf32, #tpu.memory_space<vmem>>, %arg13: memref<8x128xf32, #tpu.memory_space<vmem>>) attributes {dimension_semantics = [#tpu.dimension_semantics<parallel>], iteration_bounds = array<i64: 2>, scalar_prefetch = 0 : i64, scratch_operands = 0 : i64, tpu.core_type = #tpu.core_type<tc>, window_params = [{transform_indices = @transform_0, window_bounds = array<i64: 64, 128>}, {transform_indices = @transform_1, window_bounds = array<i64: 8, 128>}, {transform_indices = @transform_2, window_bounds = array<i64: 8, 128>}, {pipeline_mode = #tpu.pipeline_mode<synchronous>, transform_indices = @transform_3, window_bounds = array<i64: 32, 64>}, {pipeline_mode = #tpu.pipeline_mode<synchronous>, transform_indices = @transform_4, window_bounds = array<i64: 32, 1>}, {pipeline_mode = #tpu.pipeline_mode<synchronous>, transform_indices = @transform_5, window_bounds = array<i64: 16, 32>}, {pipeline_mode = #tpu.pipeline_mode<synchronous>, transform_indices = @transform_6, window_bounds = array<i64: 16, 1>}, {pipeline_mode = #tpu.pipeline_mode<synchronous>, transform_indices = @transform_7, window_bounds = array<i64: 8, 16>}, {pipeline_mode = #tpu.pipeline_mode<synchronous>, transform_indices = @transform_8, window_bounds = array<i64: 8, 1>}, {pipeline_mode = #tpu.pipeline_mode<synchronous>, transform_indices = @transform_9, window_bounds = array<i64: 8, 1>}, {pipeline_mode = #tpu.pipeline_mode<synchronous>, transform_indices = @transform_10, window_bounds = array<i64: 8, 1>}, {pipeline_mode = #tpu.pipeline_mode<synchronous>, transform_indices = @transform_11, window_bounds = array<i64: 1, 1>}, {transform_indices = @transform_12, window_bounds = array<i64: 8, 128>}]} {
    %c0 = arith.constant 0 : index
    %c0_0 = arith.constant 0 : index
    %0 = vector.load %arg1[%c0, %c0_0] : memref<64x128xf32, #tpu.memory_space<vmem>>, vector<64x128xf32>
    %c0_1 = arith.constant 0 : index
    %c0_2 = arith.constant 0 : index
    %1 = vector.load %arg4[%c0_1, %c0_2] : memref<32x64xbf16, #tpu.memory_space<vmem>>, vector<32x64xbf16>
    %c0_3 = arith.constant 0 : index
    %c0_4 = arith.constant 0 : index
    %2 = vector.load %arg5[%c0_3, %c0_4] : memref<32x1xf32, #tpu.memory_space<vmem>>, vector<32x1xf32>
    %3 = arith.truncf %0 : vector<64x128xf32> to vector<64x128xbf16>
    %cst = arith.constant dense<0.000000e+00> : vector<32x128xf32>
    %4 = tpu.matmul %1, %3, %cst {dimension_numbers = #tpu.dot_dimension_numbers<[1], [0], [0], [1], [0, 0, 1, 1], [], []>} : vector<32x64xbf16>, vector<64x128xbf16>, vector<32x128xf32> -> vector<32x128xf32>
    %5 = vector.broadcast %2 : vector<32x1xf32> to vector<32x128xf32>
    %6 = arith.addf %4, %5 : vector<32x128xf32>
    %cst_5 = arith.constant 0.000000e+00 : f32
    %7 = vector.broadcast %cst_5 : f32 to vector<32x128xf32>
    %8 = arith.maximumf %6, %7 : vector<32x128xf32>
    %c0_6 = arith.constant 0 : index
    %c0_7 = arith.constant 0 : index
    %9 = vector.load %arg6[%c0_6, %c0_7] : memref<16x32xbf16, #tpu.memory_space<vmem>>, vector<16x32xbf16>
    %c0_8 = arith.constant 0 : index
    %c0_9 = arith.constant 0 : index
    %10 = vector.load %arg7[%c0_8, %c0_9] : memref<16x1xf32, #tpu.memory_space<vmem>>, vector<16x1xf32>
    %11 = arith.truncf %8 : vector<32x128xf32> to vector<32x128xbf16>
    %cst_10 = arith.constant dense<0.000000e+00> : vector<16x128xf32>
    %12 = tpu.matmul %9, %11, %cst_10 {dimension_numbers = #tpu.dot_dimension_numbers<[1], [0], [0], [1], [0, 0, 1, 1], [], []>} : vector<16x32xbf16>, vector<32x128xbf16>, vector<16x128xf32> -> vector<16x128xf32>
    %13 = vector.broadcast %10 : vector<16x1xf32> to vector<16x128xf32>
    %14 = arith.addf %12, %13 : vector<16x128xf32>
    %cst_11 = arith.constant 0.000000e+00 : f32
    %15 = vector.broadcast %cst_11 : f32 to vector<16x128xf32>
    %16 = arith.maximumf %14, %15 : vector<16x128xf32>
    %c0_12 = arith.constant 0 : index
    %c0_13 = arith.constant 0 : index
    %17 = vector.load %arg8[%c0_12, %c0_13] : memref<8x16xbf16, #tpu.memory_space<vmem>>, vector<8x16xbf16>
    %c0_14 = arith.constant 0 : index
    %c0_15 = arith.constant 0 : index
    %18 = vector.load %arg9[%c0_14, %c0_15] : memref<8x1xf32, #tpu.memory_space<vmem>>, vector<8x1xf32>
    %19 = arith.truncf %16 : vector<16x128xf32> to vector<16x128xbf16>
    %cst_16 = arith.constant dense<0.000000e+00> : vector<8x128xf32>
    %20 = tpu.matmul %17, %19, %cst_16 {dimension_numbers = #tpu.dot_dimension_numbers<[1], [0], [0], [1], [0, 0, 1, 1], [], []>} : vector<8x16xbf16>, vector<16x128xbf16>, vector<8x128xf32> -> vector<8x128xf32>
    %21 = vector.broadcast %18 : vector<8x1xf32> to vector<8x128xf32>
    %22 = arith.addf %20, %21 : vector<8x128xf32>
    %cst_17 = arith.constant 0.000000e+00 : f32
    %23 = vector.broadcast %cst_17 : f32 to vector<8x128xf32>
    %24 = arith.maximumf %22, %23 : vector<8x128xf32>
    %c0_18 = arith.constant 0 : index
    %c0_19 = arith.constant 0 : index
    %25 = vector.load %arg10[%c0_18, %c0_19] : memref<8x1xf32, #tpu.memory_space<vmem>>, vector<8x1xf32>
    %c0_20 = arith.constant 0 : index
    %c0_21 = arith.constant 0 : index
    %26 = vector.load %arg11[%c0_20, %c0_21] : memref<8x1xf32, #tpu.memory_space<vmem>>, vector<8x1xf32>
    %c0_22 = arith.constant 0 : index
    %c0_23 = arith.constant 0 : index
    %27 = vector.load %arg12[%c0_22, %c0_23] : memref<1x1xf32, #tpu.memory_space<vmem>>, vector<1x1xf32>
    %c0_24 = arith.constant 0 : index
    %c0_25 = arith.constant 0 : index
    %28 = vector.load %arg2[%c0_24, %c0_25] : memref<8x128xf32, #tpu.memory_space<vmem>>, vector<8x128xf32>
    %c0_26 = arith.constant 0 : index
    %c0_27 = arith.constant 0 : index
    %29 = vector.load %arg3[%c0_26, %c0_27] : memref<8x128xf32, #tpu.memory_space<vmem>>, vector<8x128xf32>
    %30 = arith.mulf %28, %29 : vector<8x128xf32>
    %31 = vector.broadcast %25 : vector<8x1xf32> to vector<8x128xf32>
    %32 = arith.mulf %24, %31 : vector<8x128xf32>
    %cst_28 = arith.constant dense<0.000000e+00> : vector<128xf32>
    %33 = vector.multi_reduction <add>, %32, %cst_28 [0] : vector<8x128xf32> to vector<128xf32>
    %34 = vector.shape_cast %33 : vector<128xf32> to vector<1x128xf32>
    %35 = vector.broadcast %26 : vector<8x1xf32> to vector<8x128xf32>
    %36 = arith.mulf %30, %35 : vector<8x128xf32>
    %cst_29 = arith.constant dense<0.000000e+00> : vector<128xf32>
    %37 = vector.multi_reduction <add>, %36, %cst_29 [0] : vector<8x128xf32> to vector<128xf32>
    %38 = vector.shape_cast %37 : vector<128xf32> to vector<1x128xf32>
    %39 = arith.addf %34, %38 : vector<1x128xf32>
    %40 = vector.broadcast %27 : vector<1x1xf32> to vector<1x128xf32>
    %41 = arith.addf %39, %40 : vector<1x128xf32>
    %42 = arith.negf %41 : vector<1x128xf32>
    %43 = math.exp %42 : vector<1x128xf32>
    %cst_30 = arith.constant 1.000000e+00 : f32
    %44 = vector.broadcast %cst_30 : f32 to vector<1x128xf32>
    %45 = arith.addf %44, %43 : vector<1x128xf32>
    %46 = arith.divf %44, %45 : vector<1x128xf32>
    %47 = vector.shape_cast %46 : vector<1x128xf32> to vector<1x128xf32>
    %48 = vector.broadcast %47 : vector<1x128xf32> to vector<8x128xf32>
    %c0_31 = arith.constant 0 : index
    %c0_32 = arith.constant 0 : index
    %49 = vector.load %arg13[%c0_31, %c0_32] : memref<8x128xf32, #tpu.memory_space<vmem>>, vector<8x128xf32>
    tpu.vector_store %arg13[%c0_31, %c0_32], %48 {strides = array<i32>} : memref<8x128xf32, #tpu.memory_space<vmem>>, vector<8x128xf32>,
    return
  }
  func.func @transform_0(%arg0: i32) -> (i32, i32) {
    %c0_i32 = arith.constant 0 : i32
    %c0_i32_0 = arith.constant 0 : i32
    return %c0_i32, %arg0 : i32, i32
  }
  func.func @transform_1(%arg0: i32) -> (i32, i32) {
    %c0_i32 = arith.constant 0 : i32
    %c0_i32_0 = arith.constant 0 : i32
    return %c0_i32, %arg0 : i32, i32
  }
  func.func @transform_2(%arg0: i32) -> (i32, i32) {
    %c0_i32 = arith.constant 0 : i32
    %c0_i32_0 = arith.constant 0 : i32
    return %c0_i32, %arg0 : i32, i32
  }
  func.func @transform_3(%arg0: i32) -> (i32, i32) {
    %c0_i32 = arith.constant 0 : i32
    %c0_i32_0 = arith.constant 0 : i32
    %c0_i32_1 = arith.constant 0 : i32
    return %c0_i32, %c0_i32_0 : i32, i32
  }
  func.func @transform_4(%arg0: i32) -> (i32, i32) {
    %c0_i32 = arith.constant 0 : i32
    %c0_i32_0 = arith.constant 0 : i32
    %c0_i32_1 = arith.constant 0 : i32
    return %c0_i32, %c0_i32_0 : i32, i32
  }
  func.func @transform_5(%arg0: i32) -> (i32, i32) {
    %c0_i32 = arith.constant 0 : i32
    %c0_i32_0 = arith.constant 0 : i32
    %c0_i32_1 = arith.constant 0 : i32
    return %c0_i32, %c0_i32_0 : i32, i32
  }
  func.func @transform_6(%arg0: i32) -> (i32, i32) {
    %c0_i32 = arith.constant 0 : i32
    %c0_i32_0 = arith.constant 0 : i32
    %c0_i32_1 = arith.constant 0 : i32
    return %c0_i32, %c0_i32_0 : i32, i32
  }
  func.func @transform_7(%arg0: i32) -> (i32, i32) {
    %c0_i32 = arith.constant 0 : i32
    %c0_i32_0 = arith.constant 0 : i32
    %c0_i32_1 = arith.constant 0 : i32
    return %c0_i32, %c0_i32_0 : i32, i32
  }
  func.func @transform_8(%arg0: i32) -> (i32, i32) {
    %c0_i32 = arith.constant 0 : i32
    %c0_i32_0 = arith.constant 0 : i32
    %c0_i32_1 = arith.constant 0 : i32
    return %c0_i32, %c0_i32_0 : i32, i32
  }
  func.func @transform_9(%arg0: i32) -> (i32, i32) {
    %c0_i32 = arith.constant 0 : i32
    %c0_i32_0 = arith.constant 0 : i32
    %c0_i32_1 = arith.constant 0 : i32
    return %c0_i32, %c0_i32_0 : i32, i32
  }
  func.func @transform_10(%arg0: i32) -> (i32, i32) {
    %c0_i32 = arith.constant 0 : i32
    %c0_i32_0 = arith.constant 0 : i32
    %c0_i32_1 = arith.constant 0 : i32
    return %c0_i32, %c0_i32_0 : i32, i32
  }
  func.func @transform_11(%arg0: i32) -> (i32, i32) {
    %c0_i32 = arith.constant 0 : i32
    %c0_i32_0 = arith.constant 0 : i32
    %c0_i32_1 = arith.constant 0 : i32
    return %c0_i32, %c0_i32_0 : i32, i32
  }
  func.func @transform_12(%arg0: i32) -> (i32, i32) {
    %c0_i32 = arith.constant 0 : i32
    %c0_i32_0 = arith.constant 0 : i32
    return %c0_i32, %arg0 : i32, i32
  }
}

</mosaic_0001>

<llo_original>
// kernel: tpu_custom_call.1
$region0: #{tpu_custom_call.1}
  #allocation0 [shape = 'u32[]', space=smem, size = 0x4, offset = 0x4, fixed_abs, tag = 'smem constant byte address 0x4 - core index']
  #allocation1 [shape = 'u32[72,128]{1,0:T(1,128)}', space=vmem, size = 0x9000, scoped, tag = 'internal scratch']
  #allocation2 [shape = 'f32[1,1]{1,0:T(1,128)S(1)}', space=vmem, size = 0x200, scoped, tag = 'scoped memory for tpu_custom_call.1']
  %s0 = inlined_call_operand.hbm [shape: f32[64,256], index: 0, kind: input, shape index: {}]
  %s1 = inlined_call_operand.vmem [shape: f32[8,256], index: 1, kind: input, shape index: {}]
  %s2 = inlined_call_operand.vmem [shape: f32[8,256], index: 2, kind: input, shape index: {}]
  %s3 = inlined_call_operand.vmem [shape: bf16[32,64], index: 3, kind: input, shape index: {}]
  %s4 = inlined_call_operand.vmem [shape: f32[32,1], index: 4, kind: input, shape index: {}]
  %s5 = inlined_call_operand.vmem [shape: bf16[16,32], index: 5, kind: input, shape index: {}]
  %s6 = inlined_call_operand.vmem [shape: f32[16,1], index: 6, kind: input, shape index: {}]
  %s7 = inlined_call_operand.vmem [shape: bf16[8,16], index: 7, kind: input, shape index: {}]
  %s8 = inlined_call_operand.vmem [shape: f32[8,1], index: 8, kind: input, shape index: {}]
  %s9 = inlined_call_operand.vmem [shape: f32[8,1], index: 9, kind: input, shape index: {}]
  %s10 = inlined_call_operand.vmem [shape: f32[8,1], index: 10, kind: input, shape index: {}]
  %s11 = inlined_call_operand.<no memory space> [shape: f32[1,1], index: 11, kind: input, shape index: {}]
  %s12 = inlined_call_operand.hbm [shape: f32[8,256], index: 12, kind: output, shape index: {}]
  %s13 = sld [smem:[#allocation0]]
  $region85: #{tpu_custom_call.1} parent=0
    _
  %s15 = ssub.s32 1, %s13
  %s16 = scalar_select 0, %s15, %s13
  %v17 = vstv %s11
  %18 = vst [vmem:[#allocation2] sm:$0x1] %v17
  $region1: #{tpu_custom_call.1} parent=0
    #allocation3 [shape = 'u8[65536]{0}', space=vmem, size = 0x10000, scoped, tag = 'input window, operand 0']
    #allocation4 [shape = 's32[2]{0}', space=sflag, size = 0x8, scoped, tag = 'scoped memory for tpu_custom_call.1']
    #allocation5 [shape = 's32[2]{0}', space=sflag, size = 0x8, scoped, tag = 'scoped memory for tpu_custom_call.1']
    #allocation6 [shape = 'u8[8192]{0}', space=vmem, size = 0x2000, scoped, tag = 'output window, operand 0']
    %19 = vsyncpa [#allocation4], 0
    %s20 = scalar_lea.sflag [#allocation4], 1
    %21 = vsyncpa %s20, 0
    %22 = vsyncpa [#allocation5], 0
    %s23 = scalar_lea.sflag [#allocation5], 1
    %24 = vsyncpa %s23, 0
    loop: start=0, step=1, limit=4
    $region2: #{tpu_custom_call.1} parent=1 // loop_pre_header
      _
    $region3: #{tpu_custom_call.1} parent=1 // loop_header
      %s26 = sphi 0, %s30
      %p27 = scmp.ge.s32.totalorder %s26, 4
      %s36 = sphi 0, %s38
      %s39 = sphi 0, %s36
      %s40 = sphi 0, %s39
      %s56 = sphi 0, %s40
      %s62 = sphi 0, %s64
      %s65 = sphi 0, %s62
      %s66 = sphi 0, %s65
      %s82 = sphi 0, %s66
      %s88 = sphi 0, %s90
      %s91 = sphi 0, %s88
      %s92 = sphi 0, %s91
      %s108 = sphi 0, %s92
      %s112 = sphi 0, %s112
      %s114 = sphi 0, %s112
      %s115 = sphi 0, %s114
      %s129 = sphi 0, %s115
      %s133 = sphi 0, %s133
      %s135 = sphi 0, %s133
      %s136 = sphi 0, %s135
      %s150 = sphi 0, %s136
      %s154 = sphi 0, %s154
      %s156 = sphi 0, %s154
      %s157 = sphi 0, %s156
      %s171 = sphi 0, %s157
      %s175 = sphi 0, %s175
      %s177 = sphi 0, %s175
      %s178 = sphi 0, %s177
      %s192 = sphi 0, %s178
      %s196 = sphi 0, %s196
      %s198 = sphi 0, %s196
      %s199 = sphi 0, %s198
      %s213 = sphi 0, %s199
      %s217 = sphi 0, %s217
      %s219 = sphi 0, %s217
      %s220 = sphi 0, %s219
      %s234 = sphi 0, %s220
      %s238 = sphi 0, %s238
      %s240 = sphi 0, %s238
      %s241 = sphi 0, %s240
      %s255 = sphi 0, %s241
      %s259 = sphi 0, %s259
      %s261 = sphi 0, %s259
      %s262 = sphi 0, %s261
      %s276 = sphi 0, %s262
      %s280 = sphi 0, %s280
      %s282 = sphi 0, %s280
      %s283 = sphi 0, %s282
      %s297 = sphi 0, %s283
      %s303 = sphi 0, %s305
      %s306 = sphi 0, %s303
      %s307 = sphi 0, %s306
      %s323 = sphi 0, %s307
    $region4: #{tpu_custom_call.1} parent=1 // loop_header_branch
      %29 = sbr.rel (%p27) target = $region8
    $region5: #{tpu_custom_call.1} parent=1 // loop_body
      %s31 = ssub.s32 %s26, 1
      %s32 = ssub.s32 %s26, 2
      %s33 = sadd.s32 %s26, 1
      %s34 = ssub.s32 %s26, %s33
      %p35 = scmp.eq.s32.totalorder %s34, 0
      %s37 = sadd.s32 %s36, 1
      %s38 = scalar_select %p35, %s36, %s37
      %p41 = pneg %p35
      %p42 = scmp.eq.s32.totalorder %s26, 1
      %p43 = por %p41, %p42
      %p44 = scmp.ne.s32.totalorder %s36, %s39
      %p45 = scmp.eq.s32.totalorder %s26, 0
      %p46 = por %p44, %p45
      %p47 = scmp.ne.s32.totalorder %s36, %s39
      %p48 = scmp.eq.s32.totalorder %s31, 1
      %p49 = por %p47, %p48
      %p50 = scmp.ne.s32.totalorder %s39, %s40
      %p51 = scmp.eq.s32.totalorder %s31, 0
      %p52 = por %p50, %p51
      %p53 = scmp.ne.s32.totalorder %s39, %s40
      %p54 = scmp.eq.s32.totalorder %s32, 1
      %p55 = por %p53, %p54
      %p57 = scmp.ne.s32.totalorder %s40, %s56
      %p58 = scmp.eq.s32.totalorder %s32, 0
      %p59 = por %p57, %p58
      %s60 = ssub.s32 %s26, %s33
      %p61 = scmp.eq.s32.totalorder %s60, 0
      %s63 = sadd.s32 %s62, 1
      %s64 = scalar_select %p61, %s62, %s63
      %p67 = pneg %p61
      %p68 = scmp.eq.s32.totalorder %s26, 1
      %p69 = por %p67, %p68
      %p70 = scmp.ne.s32.totalorder %s62, %s65
      %p71 = scmp.eq.s32.totalorder %s26, 0
      %p72 = por %p70, %p71
      %p73 = scmp.ne.s32.totalorder %s62, %s65
      %p74 = scmp.eq.s32.totalorder %s31, 1
      %p75 = por %p73, %p74
      %p76 = scmp.ne.s32.totalorder %s65, %s66
      %p77 = scmp.eq.s32.totalorder %s31, 0
      %p78 = por %p76, %p77
      %p79 = scmp.ne.s32.totalorder %s65, %s66
      %p80 = scmp.eq.s32.totalorder %s32, 1
      %p81 = por %p79, %p80
      %p83 = scmp.ne.s32.totalorder %s66, %s82
      %p84 = scmp.eq.s32.totalorder %s32, 0
      %p85 = por %p83, %p84
      %s86 = ssub.s32 %s26, %s33
      %p87 = scmp.eq.s32.totalorder %s86, 0
      %s89 = sadd.s32 %s88, 1
      %s90 = scalar_select %p87, %s88, %s89
      %p93 = pneg %p87
      %p94 = scmp.eq.s32.totalorder %s26, 1
      %p95 = por %p93, %p94
      %p96 = scmp.ne.s32.totalorder %s88, %s91
      %p97 = scmp.eq.s32.totalorder %s26, 0
      %p98 = por %p96, %p97
      %p99 = scmp.ne.s32.totalorder %s88, %s91
      %p100 = scmp.eq.s32.totalorder %s31, 1
      %p101 = por %p99, %p100
      %p102 = scmp.ne.s32.totalorder %s91, %s92
      %p103 = scmp.eq.s32.totalorder %s31, 0
      %p104 = por %p102, %p103
      %p105 = scmp.ne.s32.totalorder %s91, %s92
      %p106 = scmp.eq.s32.totalorder %s32, 1
      %p107 = por %p105, %p106
      %p109 = scmp.ne.s32.totalorder %s92, %s108
      %p110 = scmp.eq.s32.totalorder %s32, 0
      %p111 = por %p109, %p110
      %s113 = sadd.s32 %s112, 1
      %p116 = scmp.eq.s32.totalorder %s26, 1
      %p117 = scmp.ne.s32.totalorder %s112, %s114
      %p118 = scmp.eq.s32.totalorder %s26, 0
      %p119 = por %p117, %p118
      %p120 = scmp.ne.s32.totalorder %s112, %s114
      %p121 = scmp.eq.s32.totalorder %s31, 1
      %p122 = por %p120, %p121
      %p123 = scmp.ne.s32.totalorder %s114, %s115
      %p124 = scmp.eq.s32.totalorder %s31, 0
      %p125 = por %p123, %p124
      %p126 = scmp.ne.s32.totalorder %s114, %s115
      %p127 = scmp.eq.s32.totalorder %s32, 1
      %p128 = por %p126, %p127
      %p130 = scmp.ne.s32.totalorder %s115, %s129
      %p131 = scmp.eq.s32.totalorder %s32, 0
      %p132 = por %p130, %p131
      %s134 = sadd.s32 %s133, 1
      %p137 = scmp.eq.s32.totalorder %s26, 1
      %p138 = scmp.ne.s32.totalorder %s133, %s135
      %p139 = scmp.eq.s32.totalorder %s26, 0
      %p140 = por %p138, %p139
      %p141 = scmp.ne.s32.totalorder %s133, %s135
      %p142 = scmp.eq.s32.totalorder %s31, 1
      %p143 = por %p141, %p142
      %p144 = scmp.ne.s32.totalorder %s135, %s136
      %p145 = scmp.eq.s32.totalorder %s31, 0
      %p146 = por %p144, %p145
      %p147 = scmp.ne.s32.totalorder %s135, %s136
      %p148 = scmp.eq.s32.totalorder %s32, 1
      %p149 = por %p147, %p148
      %p151 = scmp.ne.s32.totalorder %s136, %s150
      %p152 = scmp.eq.s32.totalorder %s32, 0
      %p153 = por %p151, %p152
      %s155 = sadd.s32 %s154, 1
      %p158 = scmp.eq.s32.totalorder %s26, 1
      %p159 = scmp.ne.s32.totalorder %s154, %s156
      %p160 = scmp.eq.s32.totalorder %s26, 0
      %p161 = por %p159, %p160
      %p162 = scmp.ne.s32.totalorder %s154, %s156
      %p163 = scmp.eq.s32.totalorder %s31, 1
      %p164 = por %p162, %p163
      %p165 = scmp.ne.s32.totalorder %s156, %s157
      %p166 = scmp.eq.s32.totalorder %s31, 0
      %p167 = por %p165, %p166
      %p168 = scmp.ne.s32.totalorder %s156, %s157
      %p169 = scmp.eq.s32.totalorder %s32, 1
      %p170 = por %p168, %p169
      %p172 = scmp.ne.s32.totalorder %s157, %s171
      %p173 = scmp.eq.s32.totalorder %s32, 0
      %p174 = por %p172, %p173
      %s176 = sadd.s32 %s175, 1
      %p179 = scmp.eq.s32.totalorder %s26, 1
      %p180 = scmp.ne.s32.totalorder %s175, %s177
      %p181 = scmp.eq.s32.totalorder %s26, 0
      %p182 = por %p180, %p181
      %p183 = scmp.ne.s32.totalorder %s175, %s177
      %p184 = scmp.eq.s32.totalorder %s31, 1
      %p185 = por %p183, %p184
      %p186 = scmp.ne.s32.totalorder %s177, %s178
      %p187 = scmp.eq.s32.totalorder %s31, 0
      %p188 = por %p186, %p187
      %p189 = scmp.ne.s32.totalorder %s177, %s178
      %p190 = scmp.eq.s32.totalorder %s32, 1
      %p191 = por %p189, %p190
      %p193 = scmp.ne.s32.totalorder %s178, %s192
      %p194 = scmp.eq.s32.totalorder %s32, 0
      %p195 = por %p193, %p194
      %s197 = sadd.s32 %s196, 1
      %p200 = scmp.eq.s32.totalorder %s26, 1
      %p201 = scmp.ne.s32.totalorder %s196, %s198
      %p202 = scmp.eq.s32.totalorder %s26, 0
      %p203 = por %p201, %p202
      %p204 = scmp.ne.s32.totalorder %s196, %s198
      %p205 = scmp.eq.s32.totalorder %s31, 1
      %p206 = por %p204, %p205
      %p207 = scmp.ne.s32.totalorder %s198, %s199
      %p208 = scmp.eq.s32.totalorder %s31, 0
      %p209 = por %p207, %p208
      %p210 = scmp.ne.s32.totalorder %s198, %s199
      %p211 = scmp.eq.s32.totalorder %s32, 1
      %p212 = por %p210, %p211
      %p214 = scmp.ne.s32.totalorder %s199, %s213
      %p215 = scmp.eq.s32.totalorder %s32, 0
      %p216 = por %p214, %p215
      %s218 = sadd.s32 %s217, 1
      %p221 = scmp.eq.s32.totalorder %s26, 1
      %p222 = scmp.ne.s32.totalorder %s217, %s219
      %p223 = scmp.eq.s32.totalorder %s26, 0
      %p224 = por %p222, %p223
      %p225 = scmp.ne.s32.totalorder %s217, %s219
      %p226 = scmp.eq.s32.totalorder %s31, 1
      %p227 = por %p225, %p226
      %p228 = scmp.ne.s32.totalorder %s219, %s220
      %p229 = scmp.eq.s32.totalorder %s31, 0
      %p230 = por %p228, %p229
      %p231 = scmp.ne.s32.totalorder %s219, %s220
      %p232 = scmp.eq.s32.totalorder %s32, 1
      %p233 = por %p231, %p232
      %p235 = scmp.ne.s32.totalorder %s220, %s234
      %p236 = scmp.eq.s32.totalorder %s32, 0
      %p237 = por %p235, %p236
      %s239 = sadd.s32 %s238, 1
      %p242 = scmp.eq.s32.totalorder %s26, 1
      %p243 = scmp.ne.s32.totalorder %s238, %s240
      %p244 = scmp.eq.s32.totalorder %s26, 0
      %p245 = por %p243, %p244
      %p246 = scmp.ne.s32.totalorder %s238, %s240
      %p247 = scmp.eq.s32.totalorder %s31, 1
      %p248 = por %p246, %p247
      %p249 = scmp.ne.s32.totalorder %s240, %s241
      %p250 = scmp.eq.s32.totalorder %s31, 0
      %p251 = por %p249, %p250
      %p252 = scmp.ne.s32.totalorder %s240, %s241
      %p253 = scmp.eq.s32.totalorder %s32, 1
      %p254 = por %p252, %p253
      %p256 = scmp.ne.s32.totalorder %s241, %s255
      %p257 = scmp.eq.s32.totalorder %s32, 0
      %p258 = por %p256, %p257
      %s260 = sadd.s32 %s259, 1
      %p263 = scmp.eq.s32.totalorder %s26, 1
      %p264 = scmp.ne.s32.totalorder %s259, %s261
      %p265 = scmp.eq.s32.totalorder %s26, 0
      %p266 = por %p264, %p265
      %p267 = scmp.ne.s32.totalorder %s259, %s261
      %p268 = scmp.eq.s32.totalorder %s31, 1
      %p269 = por %p267, %p268
      %p270 = scmp.ne.s32.totalorder %s261, %s262
      %p271 = scmp.eq.s32.totalorder %s31, 0
      %p272 = por %p270, %p271
      %p273 = scmp.ne.s32.totalorder %s261, %s262
      %p274 = scmp.eq.s32.totalorder %s32, 1
      %p275 = por %p273, %p274
      %p277 = scmp.ne.s32.totalorder %s262, %s276
      %p278 = scmp.eq.s32.totalorder %s32, 0
      %p279 = por %p277, %p278
      %s281 = sadd.s32 %s280, 1
      %p284 = scmp.eq.s32.totalorder %s26, 1
      %p285 = scmp.ne.s32.totalorder %s280, %s282
      %p286 = scmp.eq.s32.totalorder %s26, 0
      %p287 = por %p285, %p286
      %p288 = scmp.ne.s32.totalorder %s280, %s282
      %p289 = scmp.eq.s32.totalorder %s31, 1
      %p290 = por %p288, %p289
      %p291 = scmp.ne.s32.totalorder %s282, %s283
      %p292 = scmp.eq.s32.totalorder %s31, 0
      %p293 = por %p291, %p292
      %p294 = scmp.ne.s32.totalorder %s282, %s283
      %p295 = scmp.eq.s32.totalorder %s32, 1
      %p296 = por %p294, %p295
      %p298 = scmp.ne.s32.totalorder %s283, %s297
      %p299 = scmp.eq.s32.totalorder %s32, 0
      %p300 = por %p298, %p299
      %s301 = ssub.s32 %s26, %s33
      %p302 = scmp.eq.s32.totalorder %s301, 0
      %s304 = sadd.s32 %s303, 1
      %s305 = scalar_select %p302, %s303, %s304
      %p308 = pneg %p302
      %p309 = scmp.eq.s32.totalorder %s26, 1
      %p310 = por %p308, %p309
      %p311 = scmp.ne.s32.totalorder %s303, %s306
      %p312 = scmp.eq.s32.totalorder %s26, 0
      %p313 = por %p311, %p312
      %p314 = scmp.ne.s32.totalorder %s303, %s306
      %p315 = scmp.eq.s32.totalorder %s31, 1
      %p316 = por %p314, %p315
      %p317 = scmp.ne.s32.totalorder %s306, %s307
      %p318 = scmp.eq.s32.totalorder %s31, 0
      %p319 = por %p317, %p318
      %p320 = scmp.ne.s32.totalorder %s306, %s307
      %p321 = scmp.eq.s32.totalorder %s32, 1
      %p322 = por %p320, %p321
      %p324 = scmp.ne.s32.totalorder %s307, %s323
      %p325 = scmp.eq.s32.totalorder %s32, 0
      %p326 = por %p324, %p325
      %p327 = scmp.le.s32.totalorder 1, %s26
      %p328 = scmp.lt.s32.totalorder %s26, 3
      %p329 = pnand %p327, %p328
      %p330 = pneg %p329
      // Predicated region
      $region9: #{tpu_custom_call.1} parent=5 // pred_check
        _
      $region10: #{tpu_custom_call.1} parent=5 // pred_check_branch
        %332 = sbr.rel (%p329) target = $region12
      $region11: #{tpu_custom_call.1} parent=5 // pred_region
        %s333 = ssub.s32 %s26, 1
        // Predicated region
        $region13: #{tpu_custom_call.1} parent=11 // pred_check
          %p334 = pneg %p125
        $region14: #{tpu_custom_call.1} parent=11 // pred_check_branch
          %336 = sbr.rel (%p334) target = $region16
        $region15: #{tpu_custom_call.1} parent=11 // pred_region
          _
        $region16: #{tpu_custom_call.1} parent=11 // pred_fallthru
          _
        // Predicated region
        $region17: #{tpu_custom_call.1} parent=11 // pred_check
          %p337 = pneg %p146
        $region18: #{tpu_custom_call.1} parent=11 // pred_check_branch
          %339 = sbr.rel (%p337) target = $region20
        $region19: #{tpu_custom_call.1} parent=11 // pred_region
          _
        $region20: #{tpu_custom_call.1} parent=11 // pred_fallthru
          _
        // Predicated region
        $region21: #{tpu_custom_call.1} parent=11 // pred_check
          %p340 = pneg %p167
        $region22: #{tpu_custom_call.1} parent=11 // pred_check_branch
          %342 = sbr.rel (%p340) target = $region24
        $region23: #{tpu_custom_call.1} parent=11 // pred_region
          _
        $region24: #{tpu_custom_call.1} parent=11 // pred_fallthru
          _
        // Predicated region
        $region25: #{tpu_custom_call.1} parent=11 // pred_check
          %p343 = pneg %p188
        $region26: #{tpu_custom_call.1} parent=11 // pred_check_branch
          %345 = sbr.rel (%p343) target = $region28
        $region27: #{tpu_custom_call.1} parent=11 // pred_region
          _
        $region28: #{tpu_custom_call.1} parent=11 // pred_fallthru
          _
        // Predicated region
        $region29: #{tpu_custom_call.1} parent=11 // pred_check
          %p346 = pneg %p209
        $region30: #{tpu_custom_call.1} parent=11 // pred_check_branch
          %348 = sbr.rel (%p346) target = $region32
        $region31: #{tpu_custom_call.1} parent=11 // pred_region
          _
        $region32: #{tpu_custom_call.1} parent=11 // pred_fallthru
          _
        // Predicated region
        $region33: #{tpu_custom_call.1} parent=11 // pred_check
          %p349 = pneg %p230
        $region34: #{tpu_custom_call.1} parent=11 // pred_check_branch
          %351 = sbr.rel (%p349) target = $region36
        $region35: #{tpu_custom_call.1} parent=11 // pred_region
          _
        $region36: #{tpu_custom_call.1} parent=11 // pred_fallthru
          _
        // Predicated region
        $region37: #{tpu_custom_call.1} parent=11 // pred_check
          %p352 = pneg %p251
        $region38: #{tpu_custom_call.1} parent=11 // pred_check_branch
          %354 = sbr.rel (%p352) target = $region40
        $region39: #{tpu_custom_call.1} parent=11 // pred_region
          _
        $region40: #{tpu_custom_call.1} parent=11 // pred_fallthru
          _
        // Predicated region
        $region41: #{tpu_custom_call.1} parent=11 // pred_check
          %p355 = pneg %p272
        $region42: #{tpu_custom_call.1} parent=11 // pred_check_branch
          %357 = sbr.rel (%p355) target = $region44
        $region43: #{tpu_custom_call.1} parent=11 // pred_region
          _
        $region44: #{tpu_custom_call.1} parent=11 // pred_fallthru
          _
        // Predicated region
        $region45: #{tpu_custom_call.1} parent=11 // pred_check
          %p358 = pneg %p293
        $region46: #{tpu_custom_call.1} parent=11 // pred_check_branch
          %360 = sbr.rel (%p358) target = $region48
        $region47: #{tpu_custom_call.1} parent=11 // pred_region
          _
        $region48: #{tpu_custom_call.1} parent=11 // pred_fallthru
          _
      $region12: #{tpu_custom_call.1} parent=5 // pred_fallthru
        _
      %p361 = scmp.lt.s32.totalorder %s26, 2
      // Predicated region
      $region49: #{tpu_custom_call.1} parent=5 // pred_check
        %p362 = pneg %p361
      $region50: #{tpu_custom_call.1} parent=5 // pred_check_branch
        %364 = sbr.rel (%p362) target = $region52
      $region51: #{tpu_custom_call.1} parent=5 // pred_region
        // Predicated region
        $region53: #{tpu_custom_call.1} parent=51 // pred_check
          %p365 = pneg %p46
        $region54: #{tpu_custom_call.1} parent=51 // pred_check_branch
          %367 = sbr.rel (%p365) target = $region56
        $region55: #{tpu_custom_call.1} parent=51 // pred_region
          %s368 = sand.u32 %s36, 1
          %s369 = scalar_lea.sflag [#allocation4], %s368
          %s370 = sand.u32 %s36, 1
          %s371 = smul.addr %s370, 64
          %s372 = scalar_lea.vmem [#allocation3], %s371
          %374 = vsyncadd %s369, 0
          %s375 = smul.addr %s26, 8
          %s376 = scalar_lea.hbm %s0, %s375
          %s377 = sshll.u32 %s376, 4
          %s378 = int_to_ptr.hbm [resolvable:$true] %s377
          %s379 = sshll.u32 %s372, 4
          %s380 = int_to_ptr.vmem [resolvable:$true] %s379
          %385 = dma.hbm_to_vmem [thread:$0]  %s378, 1024, %s380, %s369, 256, 128, 8
        $region56: #{tpu_custom_call.1} parent=51 // pred_fallthru
          _
        // Predicated region
        $region57: #{tpu_custom_call.1} parent=51 // pred_check
          %p386 = pneg %p72
        $region58: #{tpu_custom_call.1} parent=51 // pred_check_branch
          %388 = sbr.rel (%p386) target = $region60
        $region59: #{tpu_custom_call.1} parent=51 // pred_region
          %p389 = scmp.lt.s32.totalorder %s26, 1
          %s390 = scalar_select %p389, %s26, 1
          %s391 = smul.addr %s390, 8
          %s392 = scalar_lea.vmem %s1, %s391
        $region60: #{tpu_custom_call.1} parent=51 // pred_fallthru
          _
        // Predicated region
        $region61: #{tpu_custom_call.1} parent=51 // pred_check
          %p393 = pneg %p98
        $region62: #{tpu_custom_call.1} parent=51 // pred_check_branch
          %395 = sbr.rel (%p393) target = $region64
        $region63: #{tpu_custom_call.1} parent=51 // pred_region
          %p396 = scmp.lt.s32.totalorder %s26, 1
          %s397 = scalar_select %p396, %s26, 1
          %s398 = smul.addr %s397, 8
          %s399 = scalar_lea.vmem %s2, %s398
        $region64: #{tpu_custom_call.1} parent=51 // pred_fallthru
          _
      $region52: #{tpu_custom_call.1} parent=5 // pred_fallthru
        _
      %p400 = scmp.le.s32.totalorder 1, %s26
      %p401 = scmp.lt.s32.totalorder %s26, 3
      %p402 = pnand %p400, %p401
      %p403 = pneg %p402
      // Predicated region
      $region65: #{tpu_custom_call.1} parent=5 // pred_check
        _
      $region66: #{tpu_custom_call.1} parent=5 // pred_check_branch
        %405 = sbr.rel (%p402) target = $region68
      $region67: #{tpu_custom_call.1} parent=5 // pred_region
        %s406 = ssub.s32 %s26, 1
        %s407 = sand.u32 %s39, 1
        %s408 = scalar_lea.sflag [#allocation4], %s407
        %s409 = sand.u32 %s39, 1
        %s410 = smul.addr %s409, 64
        %s411 = scalar_lea.vmem [#allocation3], %s410
        // Predicated region
        $region69: #{tpu_custom_call.1} parent=67 // pred_check
          %p412 = pneg %p52
        $region70: #{tpu_custom_call.1} parent=67 // pred_check_branch
          %414 = sbr.rel (%p412) target = $region72
        $region71: #{tpu_custom_call.1} parent=67 // pred_region
          %416 = dma.done %s408, 1024
        $region72: #{tpu_custom_call.1} parent=67 // pred_fallthru
          _
        %s417 = sand.u32 %s39, 1
        %s418 = scalar_lea.sflag [#allocation4], %s417
        %s419 = sand.u32 %s39, 1
        %s420 = smul.addr %s419, 64
        %s421 = scalar_lea.vmem [#allocation3], %s420
        %p422 = pneg %p52
        %p423 = pneg %p49
        %p424 = scmp.lt.s32.totalorder %s31, 1
        %s425 = scalar_select %p424, %s31, 1
        %s426 = smul.addr %s425, 8
        %s427 = scalar_lea.vmem %s1, %s426
        %p428 = pneg %p78
        %p429 = pneg %p75
        %p430 = scmp.lt.s32.totalorder %s31, 1
        %s431 = scalar_select %p430, %s31, 1
        %s432 = smul.addr %s431, 8
        %s433 = scalar_lea.vmem %s2, %s432
        %p434 = pneg %p104
        %p435 = pneg %p101
        %p436 = pneg %p125
        %p437 = pneg %p122
        %p438 = pneg %p146
        %p439 = pneg %p143
        %p440 = pneg %p167
        %p441 = pneg %p164
        %p442 = pneg %p188
        %p443 = pneg %p185
        %p444 = pneg %p209
        %p445 = pneg %p206
        %p446 = pneg %p230
        %p447 = pneg %p227
        %p448 = pneg %p251
        %p449 = pneg %p248
        %p450 = pneg %p272
        %p451 = pneg %p269
        %p452 = pneg %p293
        %p453 = pneg %p290
        %p454 = pneg %p319
        %p455 = pneg %p316
        %s456 = sand.u32 %s306, 1
        %s457 = scalar_lea.sflag [#allocation5], %s456
        %s458 = sand.u32 %s306, 1
        %s459 = smul.addr %s458, 8
        %s460 = scalar_lea.vmem [#allocation6], %s459
        %p461 = scmp.lt.s32.totalorder %s31, 1
        %s462 = scalar_select %p461, %s31, 1
        %s463 = smul.addr %s462, 8
        %s464 = scalar_lea.vmem %s1, %s463
        %p465 = scmp.lt.s32.totalorder %s31, 1
        %s466 = scalar_select %p465, %s31, 1
        %s467 = smul.addr %s466, 8
        %s468 = scalar_lea.vmem %s2, %s467
        %v470 = vld [vmem:[%s411] sm:$0xff]
        %v471 = vld [vmem:[%s411 + $0x8] sm:$0xff]
        %v472 = vld [vmem:[%s411 + $0x10] sm:$0xff]
        %v473 = vld [vmem:[%s411 + $0x18] sm:$0xff]
        %v474 = vld [vmem:[%s411 + $0x20] sm:$0xff]
        %v475 = vld [vmem:[%s411 + $0x28] sm:$0xff]
        %v476 = vld [vmem:[%s411 + $0x30] sm:$0xff]
        %v477 = vld [vmem:[%s411 + $0x38] sm:$0xff]
        %v478 = vld [vmem:[%s3] sm:$0xf]
        %v479 = vld [vmem:[%s3 + $0x4] sm:$0xf]
        %v480 = vld [vmem:[%s3 + $0x8] sm:$0xf]
        %v481 = vld [vmem:[%s3 + $0xc] sm:$0xf]
        %v482 = vld [vmem:[%s4] sm:$0xff]
        %v483 = vld [vmem:[%s4 + $0x8] sm:$0xff]
        %v484 = vld [vmem:[%s4 + $0x10] sm:$0xff]
        %v485 = vld [vmem:[%s4 + $0x18] sm:$0xff]
        %v486 = vpack.c.bf16 %v471, %v470
        %v487 = vpack.c.bf16 %v473, %v472
        %v488 = vpack.c.bf16 %v475, %v474
        %v489 = vpack.c.bf16 %v477, %v476
        %491 = vset.pattern.permute.xlu0 0
        %492 = vperm.xlu0 %491, %v482
        %v493 = vpop.permute.xlu0 %492
        %496 = vset.pattern.permute.xlu0 0
        %497 = vperm.xlu0 %496, %v483
        %v498 = vpop.permute.xlu0 %497
        %501 = vset.pattern.permute.xlu0 0
        %502 = vperm.xlu0 %501, %v484
        %v503 = vpop.permute.xlu0 %502
        %506 = vset.pattern.permute.xlu0 0
        %507 = vperm.xlu0 %506, %v485
        %v508 = vpop.permute.xlu0 %507
        %v514 = vunpack.c.l.b16 %v478
        %v515 = vunpack.c.l.b16 %v479
        %v516 = vunpack.c.l.b16 %v480
        %v517 = vunpack.c.l.b16 %v481
        %v518 = vpack.c.b16 %v515, %v514
        %v519 = vpack.c.b16 %v517, %v516
        %vm520 = vcmask 523264
        %v522 = vsel %vm520, %v518, 0
        %v525 = vsel %vm520, %v519, 0
        %527 = vmatpush.bf16.msra.mxu0 0
        %528 = vmatpush.bf16.msra.mxu0 0
        %529 = vmatpush.bf16.msra.mxu0 0
        %530 = vmatpush.bf16.msra.mxu0 0
        %531 = vmatpush.bf16.msra.mxu0 %v489
        %532 = vmatpush.bf16.msra.mxu0 %v488
        %533 = vmatpush.bf16.msra.mxu0 %v487
        %534 = vmatpush.bf16.msra.mxu0 %v486
        %535 = vmatmul.bf16.gmra.mxu0 %v522
        %v536 = vpop.f32.mrf.mxu0
        %v537 = vadd.f32 %v493, %v536
        %v538 = vpop.f32.mrf.mxu0
        %v539 = vadd.f32 %v498, %v538
        %540 = vmatmul.bf16.gmra.mxu0 %v525
        %v541 = vpop.f32.mrf.mxu0
        %v542 = vadd.f32 %v503, %v541
        %v543 = vpop.f32.mrf.mxu0
        %v544 = vadd.f32 %v508, %v543
        %545 = vdwg.mxu0
        %v546 = vmax.f32 %v537, 0.0
        %v547 = vmax.f32 %v539, 0.0
        %v548 = vmax.f32 %v542, 0.0
        %v549 = vmax.f32 %v544, 0.0
        %v550 = vld [vmem:[%s5] sm:$0xf]
        %v551 = vld [vmem:[%s5 + $0x4] sm:$0xf]
        %v552 = vld [vmem:[%s6] sm:$0xff]
        %v553 = vld [vmem:[%s6 + $0x8] sm:$0xff]
        %v554 = vpack.c.bf16 %v547, %v546
        %v555 = vpack.c.bf16 %v549, %v548
        %557 = vset.pattern.permute.xlu0 0
        %558 = vperm.xlu0 %557, %v552
        %v559 = vpop.permute.xlu0 %558
        %562 = vset.pattern.permute.xlu0 0
        %563 = vperm.xlu0 %562, %v553
        %v564 = vpop.permute.xlu0 %563
        %v568 = vunpack.c.l.b16 %v550
        %v569 = vunpack.c.l.b16 %v551
        %v570 = vpack.c.b16 %v569, %v568
        %vm571 = vcmask 261120
        %v573 = vsel %vm571, %v570, 0
        %575 = vmatpush.bf16.msra.mxu0 0
        %576 = vmatpush.bf16.msra.mxu0 0
        %577 = vmatpush.bf16.msra.mxu0 0
        %578 = vmatpush.bf16.msra.mxu0 0
        %579 = vmatpush.bf16.msra.mxu0 0
        %580 = vmatpush.bf16.msra.mxu0 0
        %581 = vmatpush.bf16.msra.mxu0 %v555
        %582 = vmatpush.bf16.msra.mxu0 %v554
        %583 = vmatmul.bf16.gmra.mxu0 %v573
        %v584 = vpop.f32.mrf.mxu0
        %v585 = vadd.f32 %v559, %v584
        %v586 = vpop.f32.mrf.mxu0
        %v587 = vadd.f32 %v564, %v586
        %588 = vdwg.mxu0
        %v589 = vmax.f32 %v585, 0.0
        %v590 = vmax.f32 %v587, 0.0
        %v591 = vld [vmem:[%s7] sm:$0xf]
        %v592 = vld [vmem:[%s8] sm:$0xff]
        %v593 = vpack.c.bf16 %v590, %v589
        %595 = vset.pattern.permute.xlu0 0
        %596 = vperm.xlu0 %595, %v592
        %v597 = vpop.permute.xlu0 %596
        %vm599 = vcmask 130048
        %v601 = vsel %vm599, %v591, 0
        %603 = vmatpush.bf16.msra.mxu0 0
        %604 = vmatpush.bf16.msra.mxu0 0
        %605 = vmatpush.bf16.msra.mxu0 0
        %606 = vmatpush.bf16.msra.mxu0 0
        %607 = vmatpush.bf16.msra.mxu0 0
        %608 = vmatpush.bf16.msra.mxu0 0
        %609 = vmatpush.bf16.msra.mxu0 0
        %610 = vmatpush.bf16.msra.mxu0 %v593
        %611 = vmatmul.bf16.gmra.mxu0 %v601
        %v612 = vpop.f32.mrf.mxu0
        %v613 = vadd.f32 %v597, %v612
        %v614 = vpop.f32.mrf.mxu0
        %615 = vdwg.mxu0
        %v616 = vmax.f32 %v613, 0.0
        %v617 = vld [vmem:[%s9] sm:$0xff]
        %v618 = vld [vmem:[%s10] sm:$0xff]
        %v619 = vld [vmem:[#allocation2] sm:$0x1]
        %v620 = vld [vmem:[%s464] sm:$0xff]
        %v621 = vld [vmem:[%s468] sm:$0xff]
        %v622 = vmul.f32 %v620, %v621
        %624 = vset.pattern.permute.xlu0 0
        %625 = vperm.xlu0 %624, %v617
        %v626 = vpop.permute.xlu0 %625
        %v628 = vmul.f32 %v616, %v626
        %v629 = vrot.slane %v628, 4
        %v630 = vadd.f32 %v628, %v629
        %v631 = vrot.slane %v630, 2
        %v632 = vadd.f32 %v630, %v631
        %v633 = vrot.slane %v632, 1
        %v634 = vadd.f32 %v632, %v633
        %636 = vset.pattern.permute.xlu0 0
        %637 = vperm.xlu0 %636, %v618
        %v638 = vpop.permute.xlu0 %637
        %v640 = vmul.f32 %v622, %v638
        %v641 = vrot.slane %v640, 4
        %v642 = vadd.f32 %v640, %v641
        %v643 = vrot.slane %v642, 2
        %v644 = vadd.f32 %v642, %v643
        %v645 = vrot.slane %v644, 1
        %v646 = vadd.f32 %v644, %v645
        %v647 = vadd.f32 %v634, %v646
        %649 = vset.pattern.permute.xlu0 0
        %650 = vperm.xlu0 %649, %v619
        %v651 = vpop.permute.xlu0 %650
        %v653 = vperm.slane %v651, 0
        %v654 = vadd.f32 %v647, %v653
        %v655 = vxor.u32 %v654, 2147483648
        %v656 = vmul.f32 %v655, 1.442695
        %v657 = vpow.pop %v656
        %v658 = vadd.f32 %v657, 1.0
        %v659 = vrcp.pop %v658
        %v660 = vmul.f32 %v658, %v659
        %v661 = vsub.f32 1.0, %v660
        %v662 = vmul.f32 %v659, %v661
        %v663 = vadd.f32 %v659, %v662
        %vm664 = vweird.f32 %v658
        %vm665 = vweird.f32 %v659
        %vm666 = vmor %vm664, %vm665
        %v667 = vsel %vm666, %v659, %v663
        %v668 = vand.u32 2147483647, %v658
        %vm669 = vcmp.eq.f32.partialorder %v668, 8.507059e+37
        %v670 = vand.u32 %v658, 2147483648
        %v671 = vor.u32 1.1754944e-38, %v670
        %v672 = vsel %vm669, %v671, %v667
        %v673 = vmul.f32 1.0, %v672
        %674 = vst [vmem:[%s460] sm:$0xff] %v673
        %s675 = sand.u32 %s306, 1
        %s676 = scalar_lea.sflag [#allocation5], %s675
        %s677 = sand.u32 %s306, 1
        %s678 = smul.addr %s677, 8
        %s679 = scalar_lea.vmem [#allocation6], %s678
        // Predicated region
        $region73: #{tpu_custom_call.1} parent=67 // pred_check
          %p680 = pneg %p316
        $region74: #{tpu_custom_call.1} parent=67 // pred_check_branch
          %682 = sbr.rel (%p680) target = $region76
        $region75: #{tpu_custom_call.1} parent=67 // pred_region
          %684 = vsyncadd %s676, 0
          %s685 = smul.addr %s31, 8
          %s686 = scalar_lea.hbm %s12, %s685
          %s688 = sshll.u32 %s679, 4
          %s689 = int_to_ptr.vmem [resolvable:$true] %s688
          %s690 = sshll.u32 %s686, 4
          %s691 = int_to_ptr.hbm [resolvable:$true] %s690
          %693 = dma.vmem_to_hbm [thread:$0]  %s689, 128, %s691, %s676
        $region76: #{tpu_custom_call.1} parent=67 // pred_fallthru
          _
      $region68: #{tpu_custom_call.1} parent=5 // pred_fallthru
        _
      %p694 = scmp.le.s32.totalorder 2, %s26
      // Predicated region
      $region77: #{tpu_custom_call.1} parent=5 // pred_check
        %p695 = pneg %p694
      $region78: #{tpu_custom_call.1} parent=5 // pred_check_branch
        %697 = sbr.rel (%p695) target = $region80
      $region79: #{tpu_custom_call.1} parent=5 // pred_region
        %s698 = ssub.s32 %s26, 2
        // Predicated region
        $region81: #{tpu_custom_call.1} parent=79 // pred_check
          %p699 = pneg %p322
        $region82: #{tpu_custom_call.1} parent=79 // pred_check_branch
          %701 = sbr.rel (%p699) target = $region84
        $region83: #{tpu_custom_call.1} parent=79 // pred_region
          %s702 = sand.u32 %s307, 1
          %s703 = scalar_lea.sflag [#allocation5], %s702
          %s704 = sand.u32 %s307, 1
          %s705 = smul.addr %s704, 8
          %s706 = scalar_lea.vmem [#allocation6], %s705
          %708 = dma.done %s703, 128
        $region84: #{tpu_custom_call.1} parent=79 // pred_fallthru
          _
      $region80: #{tpu_custom_call.1} parent=5 // pred_fallthru
        _
    $region6: #{tpu_custom_call.1} parent=1 // loop_footer
      %s30 = sadd.s32 1, %s26
    $region7: #{tpu_custom_call.1} parent=1 // loop_footer_branch
      %25 = sbr.rel target = $region3
    $region8: #{tpu_custom_call.1} parent=1 // loop_exit
      _
    %709 = vsyncpa [#allocation4], 1
    %s710 = scalar_lea.sflag [#allocation4], 1
    %711 = vsyncpa %s710, 1
    %712 = vsyncpa [#allocation5], 1
    %s713 = scalar_lea.sflag [#allocation5], 1
    %714 = vsyncpa %s713, 1

</llo_original>
